<compile_context>
chip_gen: v7x
topology: tpu7x:2x2x1
jax: 0.10.0
libtpu: 0.0.40
codegen_flags: <defaults>
</compile_context>

<pallas_src>
import functools

import jax
import jax.numpy as jnp
from jax.experimental import pallas as pl
from jax.experimental.pallas import tpu as pltpu


def _round_up(x, m):
    return ((x + m - 1) // m) * m


def _min_sublane(dtype):
    # Minimum second-minor tile size per element width (f32 / bf16 / int8).
    return {4: 8, 2: 16, 1: 32}[jnp.dtype(dtype).itemsize]


def _focal_kernel(preds_ref, targets_ref, out_ref, acc_ref, *, alpha, gamma,
                  m_real, tile_rows, tiles_per_core, needs_mask):
    c = pl.program_id(0)   # core-parallel axis
    i = pl.program_id(1)   # sequential reduction axis

    @pl.when(i == 0)
    def _():
        acc_ref[...] = jnp.zeros_like(acc_ref)

    x = preds_ref[...].astype(jnp.float32)
    t = targets_ref[...].astype(jnp.float32)

    # One shared exp feeds both the stable softplus and the sigmoid.
    e = jnp.exp(-jnp.abs(x))

    # Numerically-stable BCEWithLogitsLoss(reduction='none'):
    #   bce = max(x, 0) - x*t + log(1 + exp(-|x|))
    bce = jnp.maximum(x, 0.0) - x * t + jnp.log1p(e)

    # sigmoid(x) from the shared exp, using the approx EUP reciprocal plus one
    # Newton step (keeps ~f32 accuracy while avoiding a second exp / divide).
    d = 1.0 + e
    r = pl.reciprocal(d, approx=True)
    r = r * (2.0 - d * r)
    p = jnp.where(x >= 0.0, r, e * r)

    omp = 1.0 - p
    g = float(gamma)
    if g.is_integer() and 0.0 <= g <= 8.0:
        # gamma = 2.0 (default): plain VPU multiplies instead of lax.pow.
        pg = jnp.ones_like(p)
        ompg = jnp.ones_like(omp)
        for _ in range(int(g)):
            pg = pg * p
            ompg = ompg * omp
    else:
        pg = p ** gamma
        ompg = omp ** gamma

    # Keep the general (soft-label-safe) form; factor bce out of both terms.
    focal = bce * (t * (alpha * ompg) + (1.0 - t) * pg)

    if needs_mask:
        row_start = (c * tiles_per_core + i) * tile_rows
        rows = row_start + jax.lax.broadcasted_iota(jnp.int32, focal.shape, 0)
        focal = jnp.where(rows < m_real, focal, 0.0)

    # Fold the row tile onto the (8, N) accumulator with tile-aligned VPU adds.
    n = focal.shape[1]
    acc_ref[...] += focal.reshape(tile_rows // 8, 8, n).sum(axis=0)

    @pl.when(i == pl.num_programs(1) - 1)
    def _():
        out_ref[...] = acc_ref[...]


def bce_focal_loss(preds, targets, *, alpha=0.25, gamma=2.0,
                   tile_rows=1024, num_cores=2):
    assert preds.shape == targets.shape, (preds.shape, targets.shape)
    n = preds.shape[-1]
    preds2 = preds.reshape(-1, n)
    targets2 = targets.reshape(-1, n)
    m = preds2.shape[0]
    total_elems = float(m * n)

    # Minimum sublane multiple given the (possibly narrow) input dtypes.
    sub = max(_min_sublane(preds2.dtype), _min_sublane(targets2.dtype))

    # Cap the row tile so each double-buffered input buffer stays <= ~2 MiB.
    # (2 inputs x 2 buffers x 2 MiB = 8 MiB, safe even under v5e's 16 MiB
    # default scoped VMEM.)  For very large N this degrades to the minimum
    # sublane tile; tiling N as well would be the next step in that regime.
    itemsize = max(jnp.dtype(preds2.dtype).itemsize,
                   jnp.dtype(targets2.dtype).itemsize)
    vmem_rows = max(sub, (2 * 1024 * 1024 // max(1, n * itemsize)) // sub * sub)
    tr = min(tile_rows, vmem_rows, _round_up(m, sub))
    tr = max(sub, _round_up(tr, sub))

    tiles_total = pl.cdiv(m, tr)
    nc = max(1, min(num_cores, tiles_total))
    tiles_per_core = pl.cdiv(tiles_total, nc)
    m_pad = nc * tiles_per_core * tr
    if m_pad != m:
        pad = ((0, m_pad - m), (0, 0))
        preds2 = jnp.pad(preds2, pad)
        targets2 = jnp.pad(targets2, pad)

    kernel = functools.partial(
        _focal_kernel, alpha=alpha, gamma=gamma, m_real=m, tile_rows=tr,
        tiles_per_core=tiles_per_core, needs_mask=(m_pad != m))

    out = pl.pallas_call(
        kernel,
        out_shape=jax.ShapeDtypeStruct((nc * 8, n), jnp.float32),
        grid_spec=pltpu.PrefetchScalarGridSpec(
            num_scalar_prefetch=0,
            grid=(nc, tiles_per_core),
            in_specs=[
                pl.BlockSpec((tr, n), lambda c, i: (c * tiles_per_core + i, 0)),
                pl.BlockSpec((tr, n), lambda c, i: (c * tiles_per_core + i, 0)),
            ],
            out_specs=pl.BlockSpec((8, n), lambda c, i: (c, 0)),
            scratch_shapes=[pltpu.VMEM((8, n), jnp.float32)],
        ),
        compiler_params=pltpu.CompilerParams(
            dimension_semantics=("parallel", "arbitrary")),
    )(preds2, targets2)

    # Tiny epilogue reduction of the lane-dense partial-sum slab.
    return jnp.sum(out) / total_elems


def bce_focal_loss_ref(preds, targets, alpha=0.25, gamma=2.0):
    x = preds.astype(jnp.float32)
    t = targets.astype(jnp.float32)
    bce = jnp.maximum(x, 0.0) - x * t + jnp.log1p(jnp.exp(-jnp.abs(x)))
    p = jax.nn.sigmoid(x)
    loss = t * alpha * (1.0 - p) ** gamma * bce + (1.0 - t) * p ** gamma * bce
    return loss.mean()


if __name__ == "__main__":
    key = jax.random.PRNGKey(0)
    k1, k2 = jax.random.split(key)
    batch, num_classes = 16, 128
    preds = jax.random.normal(k1, (batch, num_classes), dtype=jnp.float32) * 3.0
    # Binary {0,1} targets, like multi-label classification labels.
    targets = (jax.random.uniform(k2, (batch, num_classes)) > 0.5).astype(
        jnp.float32)

    loss = bce_focal_loss(preds, targets)
    jax.block_until_ready(loss)

    ref = bce_focal_loss_ref(preds, targets)
    assert jnp.allclose(loss, ref, rtol=1e-5, atol=1e-6), (loss, ref)

    print("KERNEL_OK")
</pallas_src>

<mosaic_0001>
module attributes {stable_mosaic.version = 11 : i64} {
  func.func @_focal_kernel(%arg0: i32, %arg1: i32, %arg2: memref<16x128xf32, #tpu.memory_space<vmem>>, %arg3: memref<16x128xf32, #tpu.memory_space<vmem>>, %arg4: memref<8x128xf32, #tpu.memory_space<vmem>>, %arg5: memref<8x128xf32, #tpu.memory_space<vmem>>) attributes {dimension_semantics = [#tpu.dimension_semantics<parallel>, #tpu.dimension_semantics<arbitrary>], iteration_bounds = array<i64: 1, 1>, scalar_prefetch = 0 : i64, scratch_operands = 1 : i64, tpu.core_type = #tpu.core_type<tc>, window_params = [{transform_indices = @transform_0, window_bounds = array<i64: 16, 128>}, {transform_indices = @transform_1, window_bounds = array<i64: 16, 128>}, {transform_indices = @transform_2, window_bounds = array<i64: 8, 128>}]} {
    %c0_i32 = arith.constant 0 : i32
    %0 = arith.cmpi eq, %arg1, %c0_i32 : i32
    %1 = arith.extui %0 : i1 to i32
    %c0_i32_0 = arith.constant 0 : i32
    %2 = arith.cmpi ne, %1, %c0_i32_0 : i32
    scf.if %2 {
      %cst_20 = arith.constant 0.000000e+00 : f32
      %50 = vector.broadcast %cst_20 : f32 to vector<8x128xf32>
      %c0_21 = arith.constant 0 : index
      %c0_22 = arith.constant 0 : index
      %51 = vector.load %arg5[%c0_21, %c0_22] : memref<8x128xf32, #tpu.memory_space<vmem>>, vector<8x128xf32>
      tpu.vector_store %arg5[%c0_21, %c0_22], %50 {strides = array<i32>} : memref<8x128xf32, #tpu.memory_space<vmem>>, vector<8x128xf32>,
    } else {
    }
    %c0 = arith.constant 0 : index
    %c0_1 = arith.constant 0 : index
    %3 = vector.load %arg2[%c0, %c0_1] : memref<16x128xf32, #tpu.memory_space<vmem>>, vector<16x128xf32>
    %c0_2 = arith.constant 0 : index
    %c0_3 = arith.constant 0 : index
    %4 = vector.load %arg3[%c0_2, %c0_3] : memref<16x128xf32, #tpu.memory_space<vmem>>, vector<16x128xf32>
    %5 = math.absf %3 : vector<16x128xf32>
    %cst = arith.constant 0.000000e+00 : f32
    %6 = vector.broadcast %cst : f32 to vector<16x128xf32>
    %7 = arith.subf %6, %5 : vector<16x128xf32>
    %8 = math.exp %7 : vector<16x128xf32>
    %cst_4 = arith.constant 0.000000e+00 : f32
    %9 = vector.broadcast %cst_4 : f32 to vector<16x128xf32>
    %10 = arith.maximumf %3, %9 : vector<16x128xf32>
    %11 = arith.mulf %3, %4 : vector<16x128xf32>
    %12 = arith.subf %10, %11 : vector<16x128xf32>
    %13 = math.log1p %8 : vector<16x128xf32>
    %14 = arith.addf %12, %13 : vector<16x128xf32>
    %cst_5 = arith.constant 1.000000e+00 : f32
    %15 = vector.broadcast %cst_5 : f32 to vector<16x128xf32>
    %16 = arith.addf %15, %8 : vector<16x128xf32>
    %17 = tpu.reciprocal %16 {approx = true} : vector<16x128xf32> -> vector<16x128xf32>
    %18 = arith.mulf %16, %17 : vector<16x128xf32>
    %cst_6 = arith.constant 2.000000e+00 : f32
    %19 = vector.broadcast %cst_6 : f32 to vector<16x128xf32>
    %20 = arith.subf %19, %18 : vector<16x128xf32>
    %21 = arith.mulf %17, %20 : vector<16x128xf32>
    %cst_7 = arith.constant 0.000000e+00 : f32
    %22 = vector.broadcast %cst_7 : f32 to vector<16x128xf32>
    %23 = arith.cmpf oge, %3, %22 : vector<16x128xf32>
    %24 = arith.mulf %8, %21 : vector<16x128xf32>
    %25 = arith.select %23, %21, %24 : vector<16x128xi1>, vector<16x128xf32>
    %cst_8 = arith.constant 1.000000e+00 : f32
    %26 = vector.broadcast %cst_8 : f32 to vector<16x128xf32>
    %27 = arith.subf %26, %25 : vector<16x128xf32>
    %cst_9 = arith.constant 1.000000e+00 : f32
    %28 = vector.broadcast %cst_9 : f32 to vector<16x128xf32>
    %cst_10 = arith.constant 1.000000e+00 : f32
    %29 = vector.broadcast %cst_10 : f32 to vector<16x128xf32>
    %30 = arith.mulf %28, %25 : vector<16x128xf32>
    %31 = arith.mulf %29, %27 : vector<16x128xf32>
    %32 = arith.mulf %30, %25 : vector<16x128xf32>
    %33 = arith.mulf %31, %27 : vector<16x128xf32>
    %cst_11 = arith.constant 2.500000e-01 : f32
    %34 = vector.broadcast %cst_11 : f32 to vector<16x128xf32>
    %35 = arith.mulf %34, %33 : vector<16x128xf32>
    %36 = arith.mulf %4, %35 : vector<16x128xf32>
    %cst_12 = arith.constant 1.000000e+00 : f32
    %37 = vector.broadcast %cst_12 : f32 to vector<16x128xf32>
    %38 = arith.subf %37, %4 : vector<16x128xf32>
    %39 = arith.mulf %38, %32 : vector<16x128xf32>
    %40 = arith.addf %36, %39 : vector<16x128xf32>
    %41 = arith.mulf %14, %40 : vector<16x128xf32>
    %c0_13 = arith.constant 0 : index
    %c0_14 = arith.constant 0 : index
    %42 = vector.load %arg5[%c0_13, %c0_14] : memref<8x128xf32, #tpu.memory_space<vmem>>, vector<8x128xf32>
    %43 = vector.shape_cast %41 : vector<16x128xf32> to vector<2x8x128xf32>
    %cst_15 = arith.constant dense<0.000000e+00> : vector<8x128xf32>
    %44 = vector.multi_reduction <add>, %43, %cst_15 [0] : vector<2x8x128xf32> to vector<8x128xf32>
    %45 = arith.addf %42, %44 : vector<8x128xf32>
    %c0_16 = arith.constant 0 : index
    %c0_17 = arith.constant 0 : index
    %46 = vector.load %arg5[%c0_16, %c0_17] : memref<8x128xf32, #tpu.memory_space<vmem>>, vector<8x128xf32>
    tpu.vector_store %arg5[%c0_16, %c0_17], %45 {strides = array<i32>} : memref<8x128xf32, #tpu.memory_space<vmem>>, vector<8x128xf32>,
    %c0_i32_18 = arith.constant 0 : i32
    %47 = arith.cmpi eq, %arg1, %c0_i32_18 : i32
    %48 = arith.extui %47 : i1 to i32
    %c0_i32_19 = arith.constant 0 : i32
    %49 = arith.cmpi ne, %48, %c0_i32_19 : i32
    scf.if %49 {
      %c0_20 = arith.constant 0 : index
      %c0_21 = arith.constant 0 : index
      %50 = vector.load %arg5[%c0_20, %c0_21] : memref<8x128xf32, #tpu.memory_space<vmem>>, vector<8x128xf32>
      %c0_22 = arith.constant 0 : index
      %c0_23 = arith.constant 0 : index
      %51 = vector.load %arg4[%c0_22, %c0_23] : memref<8x128xf32, #tpu.memory_space<vmem>>, vector<8x128xf32>
      tpu.vector_store %arg4[%c0_22, %c0_23], %50 {strides = array<i32>} : memref<8x128xf32, #tpu.memory_space<vmem>>, vector<8x128xf32>,
    } else {
    }
    return
  }
  func.func @transform_0(%arg0: i32, %arg1: i32) -> (i32, i32) {
    %c1_i32 = arith.constant 1 : i32
    %0 = arith.muli %arg0, %c1_i32 : i32
    %1 = arith.addi %0, %arg1 : i32
    %c0_i32 = arith.constant 0 : i32
    %c0_i32_0 = arith.constant 0 : i32
    return %1, %c0_i32 : i32, i32
  }
  func.func @transform_1(%arg0: i32, %arg1: i32) -> (i32, i32) {
    %c1_i32 = arith.constant 1 : i32
    %0 = arith.muli %arg0, %c1_i32 : i32
    %1 = arith.addi %0, %arg1 : i32
    %c0_i32 = arith.constant 0 : i32
    %c0_i32_0 = arith.constant 0 : i32
    return %1, %c0_i32 : i32, i32
  }
  func.func @transform_2(%arg0: i32, %arg1: i32) -> (i32, i32) {
    %c0_i32 = arith.constant 0 : i32
    %c0_i32_0 = arith.constant 0 : i32
    return %arg0, %c0_i32 : i32, i32
  }
}

</mosaic_0001>

<llo_original>
// kernel: tpu_custom_call.1
$region0: #{tpu_custom_call.1}
  #allocation0 [shape = 'u32[]', space=smem, size = 0x4, offset = 0x4, fixed_abs, tag = 'smem constant byte address 0x4 - core index']
  #allocation1 [shape = 'u32[144,128]{1,0:T(1,128)}', space=vmem, size = 0x12000, scoped, tag = 'internal scratch']
  #allocation2 [shape = 'f32[8,128]{1,0:T(8,128)}', space=vmem, size = 0x1000, scoped, tag = 'scratch operand']
  %s0 = inlined_call_operand.hbm [shape: f32[16,128], index: 0, kind: input, shape index: {}]
  %s1 = inlined_call_operand.hbm [shape: f32[16,128], index: 1, kind: input, shape index: {}]
  %s2 = inlined_call_operand.hbm [shape: f32[8,128], index: 2, kind: output, shape index: {}]
  %s3 = sld [smem:[#allocation0]]
  $region34: #{tpu_custom_call.1} parent=0
    _
  %s5 = ssub.s32 1, %s3
  %s6 = scalar_select 0, %s5, %s3
  $region1: #{tpu_custom_call.1} parent=0
    #allocation3 [shape = 'u8[8192]{0}', space=vmem, size = 0x2000, scoped, tag = 'input window, operand 0, single buffered']
    #allocation4 [shape = 's32[1]{0}', space=sflag, size = 0x4, scoped, tag = 'scoped memory for tpu_custom_call.1']
    #allocation5 [shape = 's32[1]{0}', space=sflag, size = 0x4, scoped, tag = 'scoped memory for tpu_custom_call.1']
    #allocation6 [shape = 'u8[8192]{0}', space=vmem, size = 0x2000, scoped, tag = 'input window, operand 1, single buffered']
    #allocation7 [shape = 's32[1]{0}', space=sflag, size = 0x4, scoped, tag = 'scoped memory for tpu_custom_call.1']
    #allocation8 [shape = 'u8[4096]{0}', space=vmem, size = 0x1000, scoped, tag = 'output window, operand 0, single buffered']
    %7 = vsyncpa [#allocation4], 0
    %8 = vsyncpa [#allocation7], 0
    %9 = vsyncpa [#allocation5], 0
    // Predicated region
    $region2: #{tpu_custom_call.1} parent=1 // pred_check
      _
    $region3: #{tpu_custom_call.1} parent=1 // pred_check_branch
      %11 = sbr.rel (0) target = $region5
    $region4: #{tpu_custom_call.1} parent=1 // pred_region
      %s12 = sadd.s32 0, 0
      %s13 = smul.u32 2, %s12
      %s15 = ssub.s32 256, 256
      %16 = vsyncadd [#allocation4], %s15
      %s17 = smul.addr %s13, 128
      %s18 = scalar_lea.hbm %s0, %s17
      %s19 = sshll.u32 [#allocation3], 4
      %s20 = int_to_ptr.vmem [resolvable:$true] %s19
      %25 = dma.hbm_to_vmem [thread:$0]  %s18, 256, %s20, [#allocation4], 128, 128, 8
    $region5: #{tpu_custom_call.1} parent=1 // pred_fallthru
      _
    // Predicated region
    $region6: #{tpu_custom_call.1} parent=1 // pred_check
      _
    $region7: #{tpu_custom_call.1} parent=1 // pred_check_branch
      %27 = sbr.rel (0) target = $region9
    $region8: #{tpu_custom_call.1} parent=1 // pred_region
      %s28 = sadd.s32 0, 0
      %s29 = smul.u32 2, %s28
      %s31 = ssub.s32 256, 256
      %32 = vsyncadd [#allocation7], %s31
      %s33 = smul.addr %s29, 128
      %s34 = scalar_lea.hbm %s1, %s33
      %s35 = sshll.u32 [#allocation6], 4
      %s36 = int_to_ptr.vmem [resolvable:$true] %s35
      %41 = dma.hbm_to_vmem [thread:$0]  %s34, 256, %s36, [#allocation7], 128, 128, 8
    $region9: #{tpu_custom_call.1} parent=1 // pred_fallthru
      _
    // Predicated region
    $region10: #{tpu_custom_call.1} parent=1 // pred_check
      _
    $region11: #{tpu_custom_call.1} parent=1 // pred_check_branch
      %43 = sbr.rel (0) target = $region13
    $region12: #{tpu_custom_call.1} parent=1 // pred_region
      %44 = dma.done [#allocation4], 256
    $region13: #{tpu_custom_call.1} parent=1 // pred_fallthru
      _
    // Predicated region
    $region14: #{tpu_custom_call.1} parent=1 // pred_check
      _
    $region15: #{tpu_custom_call.1} parent=1 // pred_check_branch
      %46 = sbr.rel (0) target = $region17
    $region16: #{tpu_custom_call.1} parent=1 // pred_region
      %47 = dma.done [#allocation7], 256
    $region17: #{tpu_custom_call.1} parent=1 // pred_fallthru
      _
    %s48 = sadd.s32 0, 0
    %s49 = smul.u32 2, %s48
    %s50 = sadd.s32 0, 0
    %s51 = smul.u32 2, %s50
    %p52 = scmp.eq.s32.totalorder 0, 0
    // Predicated region
    $region18: #{tpu_custom_call.1} parent=1 // pred_check
      %p53 = pneg %p52
    $region19: #{tpu_custom_call.1} parent=1 // pred_check_branch
      %55 = sbr.rel (%p53) target = $region21
    $region20: #{tpu_custom_call.1} parent=1 // pred_region
      %56 = vst [vmem:[#allocation2] sm:$0xff] 0.0
    $region21: #{tpu_custom_call.1} parent=1 // pred_fallthru
      _
    %v57 = vld [vmem:[#allocation3] sm:$0xff]
    %v58 = vld [vmem:[#allocation3 + $0x8] sm:$0xff]
    %v59 = vld [vmem:[#allocation6] sm:$0xff]
    %v60 = vld [vmem:[#allocation6 + $0x8] sm:$0xff]
    %v61 = vand.u32 2147483647, %v57
    %v62 = vand.u32 2147483647, %v58
    %v63 = vsub.f32 0.0, %v61
    %v64 = vsub.f32 0.0, %v62
    %v65 = vmul.f32 %v63, 1.442695
    %v66 = vpow.pop %v65
    %v67 = vmul.f32 %v64, 1.442695
    %v68 = vpow.pop %v67
    %v69 = vmax.f32 %v57, 0.0
    %v70 = vmax.f32 %v58, 0.0
    %v71 = vmul.f32 %v57, %v59
    %v72 = vmul.f32 %v58, %v60
    %v73 = vsub.f32 %v69, %v71
    %v74 = vsub.f32 %v70, %v72
    %v75 = vadd.f32 %v66, 1.0
    %v76 = vlog2.pop %v75
    %v77 = vmul.f32 %v76, 0.6931472
    %v78 = vmul.f32 -0.5, %v66
    %v79 = vadd.f32 %v78, 1.0
    %v80 = vmul.f32 %v79, %v66
    %v81 = vand.u32 2147483647, %v66
    %vm82 = vcmp.lt.f32.partialorder %v81, 0.0004427343
    %v83 = vsel %vm82, %v80, %v77
    %v84 = vadd.f32 %v68, 1.0
    %v85 = vlog2.pop %v84
    %v86 = vmul.f32 %v85, 0.6931472
    %v87 = vmul.f32 -0.5, %v68
    %v88 = vadd.f32 %v87, 1.0
    %v89 = vmul.f32 %v88, %v68
    %v90 = vand.u32 2147483647, %v68
    %vm91 = vcmp.lt.f32.partialorder %v90, 0.0004427343
    %v92 = vsel %vm91, %v89, %v86
    %v93 = vadd.f32 %v73, %v83
    %v94 = vadd.f32 %v74, %v92
    %v95 = vadd.f32 %v66, 1.0
    %v96 = vadd.f32 %v68, 1.0
    %v97 = vrcp.pop %v95
    %v98 = vrcp.pop %v96
    %v99 = vmul.f32 %v95, %v97
    %v100 = vmul.f32 %v96, %v98
    %v101 = vsub.f32 2.0, %v99
    %v102 = vsub.f32 2.0, %v100
    %v103 = vmul.f32 %v97, %v101
    %v104 = vmul.f32 %v98, %v102
    %vm105 = vcmp.ge.f32.partialorder %v57, 0.0
    %vm106 = vcmp.ge.f32.partialorder %v58, 0.0
    %v107 = vmul.f32 %v66, %v103
    %v108 = vmul.f32 %v68, %v104
    %v109 = vsel %vm105, %v103, %v107
    %v110 = vsel %vm106, %v104, %v108
    %v111 = vsub.f32 1.0, %v109
    %v112 = vsub.f32 1.0, %v110
    %v113 = vmul.f32 %v109, %v109
    %v114 = vmul.f32 %v110, %v110
    %v115 = vmul.f32 %v111, %v111
    %v116 = vmul.f32 %v112, %v112
    %v117 = vmul.f32 %v115, 0.25
    %v118 = vmul.f32 %v116, 0.25
    %v119 = vmul.f32 %v59, %v117
    %v120 = vmul.f32 %v60, %v118
    %v121 = vsub.f32 1.0, %v59
    %v122 = vsub.f32 1.0, %v60
    %v123 = vmul.f32 %v121, %v113
    %v124 = vmul.f32 %v122, %v114
    %v125 = vadd.f32 %v119, %v123
    %v126 = vadd.f32 %v120, %v124
    %v127 = vmul.f32 %v93, %v125
    %v128 = vmul.f32 %v94, %v126
    %v129 = vld [vmem:[#allocation2] sm:$0xff]
    %v130 = vadd.f32 %v127, %v128
    %v131 = vadd.f32 %v129, %v130
    %132 = vst [vmem:[#allocation2] sm:$0xff] %v131
    // Predicated region
    $region22: #{tpu_custom_call.1} parent=1 // pred_check
      %p133 = pneg %p52
    $region23: #{tpu_custom_call.1} parent=1 // pred_check_branch
      %135 = sbr.rel (%p133) target = $region25
    $region24: #{tpu_custom_call.1} parent=1 // pred_region
      %v136 = vld [vmem:[#allocation2] sm:$0xff]
      %137 = vst [vmem:[#allocation8] sm:$0xff] %v136
    $region25: #{tpu_custom_call.1} parent=1 // pred_fallthru
      _
    // Predicated region
    $region26: #{tpu_custom_call.1} parent=1 // pred_check
      _
    $region27: #{tpu_custom_call.1} parent=1 // pred_check_branch
      %139 = sbr.rel (0) target = $region29
    $region28: #{tpu_custom_call.1} parent=1 // pred_region
      %s141 = ssub.s32 128, 128
      %142 = vsyncadd [#allocation5], %s141
      %s144 = sshll.u32 [#allocation8], 4
      %s145 = int_to_ptr.vmem [resolvable:$true] %s144
      %147 = dma.vmem_to_hbm [thread:$0]  %s145, 128, %s2, [#allocation5]
    $region29: #{tpu_custom_call.1} parent=1 // pred_fallthru
      _
    // Predicated region
    $region30: #{tpu_custom_call.1} parent=1 // pred_check
      _
    $region31: #{tpu_custom_call.1} parent=1 // pred_check_branch
      %149 = sbr.rel (0) target = $region33
    $region32: #{tpu_custom_call.1} parent=1 // pred_region
      %150 = dma.done [#allocation5], 128
    $region33: #{tpu_custom_call.1} parent=1 // pred_fallthru
      _
    %151 = vsyncpa [#allocation4], 1
    %152 = vsyncpa [#allocation7], 1
    %153 = vsyncpa [#allocation5], 1

</llo_original>
